<compile_context>
chip_gen: v5e
topology: v5e:2x2
jax: 0.10.0
libtpu: 0.0.40
codegen_flags: <defaults>
</compile_context>

<pallas_src>
import functools

import jax
import jax.numpy as jnp
from jax.experimental import pallas as pl
from jax.experimental.pallas import tpu as pltpu

_LANES = 128


def _linear_norm_kernel(x_ref, wb_ref, o_ref, *, eps, inv_nm1, f_real, f_pad):
    """One batch tile: out = w * (x - mean) / (std + eps) + b (row-wise stats)."""
    x = x_ref[...].astype(jnp.float32)                       # (TB, Fp)
    # Padded feature columns (if any) are zero, so the row sum over Fp equals
    # the row sum over the real F columns; divide by the real feature count.
    mean = jnp.sum(x, axis=1, keepdims=True) * (1.0 / f_real)
    d = x - mean                                             # reused for the output
    d2 = d * d
    if f_pad != f_real:
        # Exclude padded columns from the variance (each would add mean^2).
        lane = jax.lax.broadcasted_iota(jnp.int32, (1, f_pad), 1)
        d2 = jnp.where(lane < f_real, d2, 0.0)
    # torch.std default is unbiased (ddof=1) -> divide by (F-1), folded to a mul.
    var = jnp.sum(d2, axis=1, keepdims=True) * inv_nm1
    std = jnp.sqrt(var)
    # eps is added to std (torch semantics) — do NOT fold into rsqrt(var + eps).
    # Exact divide on a (TB, 1) column: free in an HBM-bound kernel and keeps
    # bit-closeness to the PyTorch reference.
    inv = 1.0 / (std + eps)
    w = wb_ref[0:1, :].astype(jnp.float32)                   # (1, Fp)
    b = wb_ref[1:2, :].astype(jnp.float32)                   # (1, Fp)
    o_ref[...] = (w * (d * inv) + b).astype(o_ref.dtype)


def _pick_tile_rows(B, F_pad, itemsize):
    """Batch-tile rows + explicit VMEM limit, sized per TPU generation.

    Counts the double-buffered streaming HBM tiles (x, out) AND the f32
    in-kernel working set, so bf16/fp8 inputs can't silently overshoot VMEM.
    """
    try:
        phys = int(getattr(pltpu.get_tpu_info(), "vmem_capacity_bytes"))
    except Exception:
        phys = 64 << 20                      # conservative: v7x per-TC VMEM
    # Explicit scoped limit (overrides the small v5e/v6e defaults), with
    # headroom below physical for compiler-internal scratch.
    vmem_limit = min((phys * 3) // 4, 96 << 20)

    io_per_row = 2 * 2 * F_pad * itemsize    # (x + out) x 2 pipeline buffers
    f32_per_row = 3 * F_pad * 4              # f32 copy, centered d, product temp
    per_row = io_per_row + f32_per_row

    budget = (vmem_limit * 3) // 4           # keep ~25% slack inside the limit
    tb = budget // per_row
    tb = max(8, min(int(tb), 2048))          # 2048-row cap for narrow features
    tb = (tb // 8) * 8                       # sublane-aligned
    if tb >= B:
        tb = B                               # single block == full dim (legal)
    return tb, vmem_limit


def linear_normalization(x, weights, bias, eps=1e-10):
    """x: (B, F); weights, bias: (F,). Returns (B, F) matching the torch forward."""
    B, F = x.shape
    if F <= 1:
        # torch.std of a single unbiased sample is NaN; keep that behavior.
        inv_nm1 = float("nan")
    else:
        inv_nm1 = 1.0 / float(F - 1)

    # Lane-dense layout: pad the feature axis to a multiple of 128 so stores
    # are unmasked and all 128 lanes are used (only matters for small / odd F;
    # BERT widths 768/1024 already satisfy this and take the no-pad path).
    F_pad = ((F + _LANES - 1) // _LANES) * _LANES
    wb = jnp.stack([weights, bias]).astype(jnp.float32)      # (2, F)
    if F_pad != F:
        x_in = jnp.pad(x, ((0, 0), (0, F_pad - F)))
        wb_in = jnp.pad(wb, ((0, 0), (0, F_pad - F)))
    else:
        x_in, wb_in = x, wb

    tb, vmem_limit = _pick_tile_rows(B, F_pad, jnp.dtype(x.dtype).itemsize)
    grid = (pl.cdiv(B, tb),)

    kernel = functools.partial(
        _linear_norm_kernel,
        eps=float(eps),
        inv_nm1=inv_nm1,
        f_real=F,
        f_pad=F_pad,
    )

    def build(dim_semantics):
        return pl.pallas_call(
            kernel,
            out_shape=jax.ShapeDtypeStruct((B, F_pad), x.dtype),
            grid=grid,
            in_specs=[
                pl.BlockSpec((tb, F_pad), lambda i: (i, 0)),   # x: streamed over batch
                pl.BlockSpec((2, F_pad), lambda i: (0, 0)),    # [weights; bias]: resident
            ],
            out_specs=pl.BlockSpec((tb, F_pad), lambda i: (i, 0)),
            compiler_params=pltpu.CompilerParams(
                dimension_semantics=dim_semantics,
                vmem_limit_bytes=int(vmem_limit),
            ),
        )

    # Prefer CORE_PARALLEL: actually shards the independent batch axis across
    # both TensorCores on multi-TC chips (v7x) — up to ~2x for this HBM-bound
    # kernel. Fall back to "parallel" where core-parallel grids are rejected.
    last_err = None
    for sem in ((pltpu.CORE_PARALLEL,), ("parallel",)):
        try:
            out = build(sem)(x_in, wb_in)
            jax.block_until_ready(out)       # surface compile/runtime errors here
            return out[:, :F] if F_pad != F else out
        except Exception as e:               # noqa: BLE001 - retry with fallback
            last_err = e
    raise last_err


if __name__ == "__main__":
    key = jax.random.PRNGKey(0)

    def check(batch, features):
        kx = jax.random.fold_in(key, features)
        x = jax.random.normal(kx, (batch, features), dtype=jnp.float32)
        # Deterministic params, matching nn.Parameter(torch.ones/zeros(features)).
        weights = jnp.ones((features,), dtype=jnp.float32)
        bias = jnp.zeros((features,), dtype=jnp.float32)
        eps = 1e-10

        out = jax.block_until_ready(linear_normalization(x, weights, bias, eps))

        # Plain-JAX reference (unbiased std, same as torch.std default).
        mean = jnp.mean(x, axis=1, keepdims=True)
        std = jnp.sqrt(jnp.sum((x - mean) ** 2, axis=1, keepdims=True) / (features - 1))
        ref = weights * (x - mean) / (std + eps) + bias
        assert out.shape == ref.shape and out.dtype == ref.dtype
        assert jnp.allclose(out, ref, atol=1e-4, rtol=1e-4), (
            f"mismatch vs reference at batch={batch}, features={features}")

    check(8, 32)     # F < 128: exercises the lane-padded (lane-dense) path
    check(16, 128)   # F multiple of 128: no-padding path
    print("KERNEL_OK")
</pallas_src>

<mosaic_0001>
module attributes {stable_mosaic.version = 11 : i64} {
  func.func @_linear_norm_kernel(%arg0: i32, %arg1: memref<8x128xf32, #tpu.memory_space<vmem>>, %arg2: memref<2x128xf32, #tpu.memory_space<vmem>>, %arg3: memref<8x128xf32, #tpu.memory_space<vmem>>) attributes {dimension_semantics = [#tpu.dimension_semantics<core_parallel>], iteration_bounds = array<i64: 1>, scalar_prefetch = 0 : i64, scratch_operands = 0 : i64, tpu.core_type = #tpu.core_type<tc>, window_params = [{transform_indices = @transform_0, window_bounds = array<i64: 8, 128>}, {pipeline_mode = #tpu.pipeline_mode<synchronous>, transform_indices = @transform_1, window_bounds = array<i64: 2, 128>}, {transform_indices = @transform_2, window_bounds = array<i64: 8, 128>}]} {
    %c0 = arith.constant 0 : index
    %c0_0 = arith.constant 0 : index
    %0 = vector.load %arg1[%c0, %c0_0] : memref<8x128xf32, #tpu.memory_space<vmem>>, vector<8x128xf32>
    %cst = arith.constant dense<0.000000e+00> : vector<8xf32>
    %1 = vector.multi_reduction <add>, %0, %cst [1] : vector<8x128xf32> to vector<8xf32>
    %2 = vector.shape_cast %1 : vector<8xf32> to vector<8x1xf32>
    %cst_1 = arith.constant 3.125000e-02 : f32
    %3 = vector.broadcast %cst_1 : f32 to vector<8x1xf32>
    %4 = arith.mulf %2, %3 : vector<8x1xf32>
    %5 = vector.broadcast %4 : vector<8x1xf32> to vector<8x128xf32>
    %6 = arith.subf %0, %5 : vector<8x128xf32>
    %7 = arith.mulf %6, %6 : vector<8x128xf32>
    %8 = tpu.iota {dimensions = array<i32: 1>} : vector<1x128xi32>
    %c32_i32 = arith.constant 32 : i32
    %9 = vector.broadcast %c32_i32 : i32 to vector<1x128xi32>
    %10 = arith.cmpi slt, %8, %9 : vector<1x128xi32>
    %cst_2 = arith.constant 0.000000e+00 : f32
    %11 = vector.shape_cast %10 : vector<1x128xi1> to vector<1x128xi1>
    %12 = vector.broadcast %11 : vector<1x128xi1> to vector<8x128xi1>
    %13 = vector.broadcast %cst_2 : f32 to vector<8x128xf32>
    %14 = arith.select %12, %7, %13 : vector<8x128xi1>, vector<8x128xf32>
    %cst_3 = arith.constant dense<0.000000e+00> : vector<8xf32>
    %15 = vector.multi_reduction <add>, %14, %cst_3 [1] : vector<8x128xf32> to vector<8xf32>
    %16 = vector.shape_cast %15 : vector<8xf32> to vector<8x1xf32>
    %cst_4 = arith.constant 0.0322580636 : f32
    %17 = vector.broadcast %cst_4 : f32 to vector<8x1xf32>
    %18 = arith.mulf %16, %17 : vector<8x1xf32>
    %19 = math.sqrt %18 : vector<8x1xf32>
    %cst_5 = arith.constant 1.000000e-10 : f32
    %20 = vector.broadcast %cst_5 : f32 to vector<8x1xf32>
    %21 = arith.addf %19, %20 : vector<8x1xf32>
    %cst_6 = arith.constant 1.000000e+00 : f32
    %22 = vector.broadcast %cst_6 : f32 to vector<8x1xf32>
    %23 = arith.divf %22, %21 : vector<8x1xf32>
    %c0_7 = arith.constant 0 : index
    %c0_8 = arith.constant 0 : index
    %24 = vector.load %arg2[%c0_7, %c0_8] : memref<2x128xf32, #tpu.memory_space<vmem>>, vector<1x128xf32>
    %c1 = arith.constant 1 : index
    %c0_9 = arith.constant 0 : index
    %25 = vector.load %arg2[%c1, %c0_9] : memref<2x128xf32, #tpu.memory_space<vmem>>, vector<1x128xf32>
    %26 = vector.broadcast %23 : vector<8x1xf32> to vector<8x128xf32>
    %27 = arith.mulf %6, %26 : vector<8x128xf32>
    %28 = vector.broadcast %24 : vector<1x128xf32> to vector<8x128xf32>
    %29 = arith.mulf %28, %27 : vector<8x128xf32>
    %30 = vector.broadcast %25 : vector<1x128xf32> to vector<8x128xf32>
    %31 = arith.addf %29, %30 : vector<8x128xf32>
    %c0_10 = arith.constant 0 : index
    %c0_11 = arith.constant 0 : index
    %32 = vector.load %arg3[%c0_10, %c0_11] : memref<8x128xf32, #tpu.memory_space<vmem>>, vector<8x128xf32>
    tpu.vector_store %arg3[%c0_10, %c0_11], %31 {strides = array<i32>} : memref<8x128xf32, #tpu.memory_space<vmem>>, vector<8x128xf32>,
    return
  }
  func.func @transform_0(%arg0: i32) -> (i32, i32) {
    %c0_i32 = arith.constant 0 : i32
    %c0_i32_0 = arith.constant 0 : i32
    return %arg0, %c0_i32 : i32, i32
  }
  func.func @transform_1(%arg0: i32) -> (i32, i32) {
    %c0_i32 = arith.constant 0 : i32
    %c0_i32_0 = arith.constant 0 : i32
    %c0_i32_1 = arith.constant 0 : i32
    return %c0_i32, %c0_i32_0 : i32, i32
  }
  func.func @transform_2(%arg0: i32) -> (i32, i32) {
    %c0_i32 = arith.constant 0 : i32
    %c0_i32_0 = arith.constant 0 : i32
    return %arg0, %c0_i32 : i32, i32
  }
}

module attributes {stable_mosaic.version = 11 : i64} {
  func.func @_linear_norm_kernel(%arg0: i32, %arg1: memref<8x128xf32, #tpu.memory_space<vmem>>, %arg2: memref<2x128xf32, #tpu.memory_space<vmem>>, %arg3: memref<8x128xf32, #tpu.memory_space<vmem>>) attributes {dimension_semantics = [#tpu.dimension_semantics<parallel>], iteration_bounds = array<i64: 1>, scalar_prefetch = 0 : i64, scratch_operands = 0 : i64, tpu.core_type = #tpu.core_type<tc>, window_params = [{transform_indices = @transform_0, window_bounds = array<i64: 8, 128>}, {pipeline_mode = #tpu.pipeline_mode<synchronous>, transform_indices = @transform_1, window_bounds = array<i64: 2, 128>}, {transform_indices = @transform_2, window_bounds = array<i64: 8, 128>}]} {
    %c0 = arith.constant 0 : index
    %c0_0 = arith.constant 0 : index
    %0 = vector.load %arg1[%c0, %c0_0] : memref<8x128xf32, #tpu.memory_space<vmem>>, vector<8x128xf32>
    %cst = arith.constant dense<0.000000e+00> : vector<8xf32>
    %1 = vector.multi_reduction <add>, %0, %cst [1] : vector<8x128xf32> to vector<8xf32>
    %2 = vector.shape_cast %1 : vector<8xf32> to vector<8x1xf32>
    %cst_1 = arith.constant 3.125000e-02 : f32
    %3 = vector.broadcast %cst_1 : f32 to vector<8x1xf32>
    %4 = arith.mulf %2, %3 : vector<8x1xf32>
    %5 = vector.broadcast %4 : vector<8x1xf32> to vector<8x128xf32>
    %6 = arith.subf %0, %5 : vector<8x128xf32>
    %7 = arith.mulf %6, %6 : vector<8x128xf32>
    %8 = tpu.iota {dimensions = array<i32: 1>} : vector<1x128xi32>
    %c32_i32 = arith.constant 32 : i32
    %9 = vector.broadcast %c32_i32 : i32 to vector<1x128xi32>
    %10 = arith.cmpi slt, %8, %9 : vector<1x128xi32>
    %cst_2 = arith.constant 0.000000e+00 : f32
    %11 = vector.shape_cast %10 : vector<1x128xi1> to vector<1x128xi1>
    %12 = vector.broadcast %11 : vector<1x128xi1> to vector<8x128xi1>
    %13 = vector.broadcast %cst_2 : f32 to vector<8x128xf32>
    %14 = arith.select %12, %7, %13 : vector<8x128xi1>, vector<8x128xf32>
    %cst_3 = arith.constant dense<0.000000e+00> : vector<8xf32>
    %15 = vector.multi_reduction <add>, %14, %cst_3 [1] : vector<8x128xf32> to vector<8xf32>
    %16 = vector.shape_cast %15 : vector<8xf32> to vector<8x1xf32>
    %cst_4 = arith.constant 0.0322580636 : f32
    %17 = vector.broadcast %cst_4 : f32 to vector<8x1xf32>
    %18 = arith.mulf %16, %17 : vector<8x1xf32>
    %19 = math.sqrt %18 : vector<8x1xf32>
    %cst_5 = arith.constant 1.000000e-10 : f32
    %20 = vector.broadcast %cst_5 : f32 to vector<8x1xf32>
    %21 = arith.addf %19, %20 : vector<8x1xf32>
    %cst_6 = arith.constant 1.000000e+00 : f32
    %22 = vector.broadcast %cst_6 : f32 to vector<8x1xf32>
    %23 = arith.divf %22, %21 : vector<8x1xf32>
    %c0_7 = arith.constant 0 : index
    %c0_8 = arith.constant 0 : index
    %24 = vector.load %arg2[%c0_7, %c0_8] : memref<2x128xf32, #tpu.memory_space<vmem>>, vector<1x128xf32>
    %c1 = arith.constant 1 : index
    %c0_9 = arith.constant 0 : index
    %25 = vector.load %arg2[%c1, %c0_9] : memref<2x128xf32, #tpu.memory_space<vmem>>, vector<1x128xf32>
    %26 = vector.broadcast %23 : vector<8x1xf32> to vector<8x128xf32>
    %27 = arith.mulf %6, %26 : vector<8x128xf32>
    %28 = vector.broadcast %24 : vector<1x128xf32> to vector<8x128xf32>
    %29 = arith.mulf %28, %27 : vector<8x128xf32>
    %30 = vector.broadcast %25 : vector<1x128xf32> to vector<8x128xf32>
    %31 = arith.addf %29, %30 : vector<8x128xf32>
    %c0_10 = arith.constant 0 : index
    %c0_11 = arith.constant 0 : index
    %32 = vector.load %arg3[%c0_10, %c0_11] : memref<8x128xf32, #tpu.memory_space<vmem>>, vector<8x128xf32>
    tpu.vector_store %arg3[%c0_10, %c0_11], %31 {strides = array<i32>} : memref<8x128xf32, #tpu.memory_space<vmem>>, vector<8x128xf32>,
    return
  }
  func.func @transform_0(%arg0: i32) -> (i32, i32) {
    %c0_i32 = arith.constant 0 : i32
    %c0_i32_0 = arith.constant 0 : i32
    return %arg0, %c0_i32 : i32, i32
  }
  func.func @transform_1(%arg0: i32) -> (i32, i32) {
    %c0_i32 = arith.constant 0 : i32
    %c0_i32_0 = arith.constant 0 : i32
    %c0_i32_1 = arith.constant 0 : i32
    return %c0_i32, %c0_i32_0 : i32, i32
  }
  func.func @transform_2(%arg0: i32) -> (i32, i32) {
    %c0_i32 = arith.constant 0 : i32
    %c0_i32_0 = arith.constant 0 : i32
    return %arg0, %c0_i32 : i32, i32
  }
}

</mosaic_0001>

<llo_original>
// kernel: tpu_custom_call.1
$region0: #{tpu_custom_call.1}
  #allocation0 [shape = 'u32[]', space=smem, size = 0x4, offset = 0x4, fixed_abs, tag = 'smem constant byte address 0x4 - core index']
  #allocation1 [shape = 'u32[72,128]{1,0:T(1,128)}', space=vmem, size = 0x9000, scoped, tag = 'internal scratch']
  %s0 = inlined_call_operand.hbm [shape: f32[8,128], index: 0, kind: input, shape index: {}]
  %s1 = inlined_call_operand.hbm [shape: f32[2,128], index: 1, kind: input, shape index: {}]
  %s2 = inlined_call_operand.hbm [shape: f32[8,128], index: 2, kind: output, shape index: {}]
  %s3 = sld [smem:[#allocation0]]
  $region26: #{tpu_custom_call.1} parent=0
    _
  %s5 = ssub.s32 1, %s3
  %s6 = scalar_select 0, %s5, %s3
  $region1: #{tpu_custom_call.1} parent=0
    #allocation2 [shape = 'u8[4096]{0}', space=vmem, size = 0x1000, scoped, tag = 'input window, operand 0, single buffered']
    #allocation3 [shape = 's32[1]{0}', space=sflag, size = 0x4, scoped, tag = 'scoped memory for tpu_custom_call.1']
    #allocation4 [shape = 's32[1]{0}', space=sflag, size = 0x4, scoped, tag = 'scoped memory for tpu_custom_call.1']
    #allocation5 [shape = 'u8[1024]{0}', space=vmem, size = 0x400, scoped, tag = 'input window, operand 1, single buffered']
    #allocation6 [shape = 's32[1]{0}', space=sflag, size = 0x4, scoped, tag = 'scoped memory for tpu_custom_call.1']
    #allocation7 [shape = 'u8[4096]{0}', space=vmem, size = 0x1000, scoped, tag = 'output window, operand 0, single buffered']
    %7 = vsyncpa [#allocation3], 0
    %8 = vsyncpa [#allocation6], 0
    %9 = vsyncpa [#allocation4], 0
    // Predicated region
    $region2: #{tpu_custom_call.1} parent=1 // pred_check
      _
    $region3: #{tpu_custom_call.1} parent=1 // pred_check_branch
      %11 = sbr.rel (0) target = $region5
    $region4: #{tpu_custom_call.1} parent=1 // pred_region
      %13 = vsyncadd [#allocation3], 0
      %s14 = smul.addr %s6, 8
      %s15 = scalar_lea.hbm %s0, %s14
      %s17 = sshll.u32 %s15, 4
      %s18 = int_to_ptr.hbm [resolvable:$true] %s17
      %s19 = sshll.u32 [#allocation2], 4
      %s20 = int_to_ptr.vmem [resolvable:$true] %s19
      %22 = dma.hbm_to_vmem [thread:$0]  %s18, 128, %s20, [#allocation3]
    $region5: #{tpu_custom_call.1} parent=1 // pred_fallthru
      _
    // Predicated region
    $region6: #{tpu_custom_call.1} parent=1 // pred_check
      _
    $region7: #{tpu_custom_call.1} parent=1 // pred_check_branch
      %24 = sbr.rel (0) target = $region9
    $region8: #{tpu_custom_call.1} parent=1 // pred_region
      %26 = vsyncadd [#allocation6], 0
      %s28 = sshll.u32 %s1, 4
      %s29 = int_to_ptr.hbm [resolvable:$true] %s28
      %s30 = sshll.u32 [#allocation5], 4
      %s31 = int_to_ptr.vmem [resolvable:$true] %s30
      %33 = dma.hbm_to_vmem [thread:$0]  %s29, 32, %s31, [#allocation6]
    $region9: #{tpu_custom_call.1} parent=1 // pred_fallthru
      _
    // Predicated region
    $region10: #{tpu_custom_call.1} parent=1 // pred_check
      _
    $region11: #{tpu_custom_call.1} parent=1 // pred_check_branch
      %35 = sbr.rel (0) target = $region13
    $region12: #{tpu_custom_call.1} parent=1 // pred_region
      %37 = dma.done [#allocation3], 128
    $region13: #{tpu_custom_call.1} parent=1 // pred_fallthru
      _
    // Predicated region
    $region14: #{tpu_custom_call.1} parent=1 // pred_check
      _
    $region15: #{tpu_custom_call.1} parent=1 // pred_check_branch
      %39 = sbr.rel (0) target = $region17
    $region16: #{tpu_custom_call.1} parent=1 // pred_region
      %41 = dma.done [#allocation6], 32
    $region17: #{tpu_custom_call.1} parent=1 // pred_fallthru
      _
    %v42 = vld [vmem:[#allocation2] sm:$0xff]
    %43 = vadd.xlane.f32.xlu0 %v42
    %v44 = vpop.xlane.xlu0 %43
    %v45 = vmul.f32 %v44, 0.03125
    %v46 = vsub.f32 %v42, %v45
    %v47 = vmul.f32 %v46, %v46
    %v48 = vlaneseq
    %v49 = vand.u32 %v48, 127
    %vm50 = vcmp.lt.s32.totalorder %v49, 32
    %v51 = vsel %vm50, 1, 0
    %vm52 = vcmp.eq.s32.totalorder %v51, 1
    %v53 = vsel %vm52, %v47, 0.0
    %54 = vadd.xlane.f32.xlu0 %v53
    %v55 = vpop.xlane.xlu0 %54
    %v56 = vmul.f32 %v55, 0.032258064
    %v57 = vrsqrt.pop %v56
    %v58 = vmul.f32 %v57, %v56
    %v59 = vmul.f32 %v58, %v57
    %v60 = vmul.f32 0.5, %v59
    %v61 = vsub.f32 1.5, %v60
    %v62 = vmul.f32 %v57, %v61
    %v63 = vmul.f32 %v56, %v62
    %vm64 = vcmp.eq.f32.partialorder %v56, inf
    %v65 = vsel %vm64, %v56, %v63
    %vm66 = vcmp.eq.f32.partialorder %v56, 0.0
    %v67 = vand.u32 %v56, 2147483648
    %v68 = vsel %vm66, %v67, %v65
    %v69 = vadd.f32 %v68, 1e-10
    %v70 = vrcp.pop %v69
    %v71 = vmul.f32 %v69, %v70
    %v72 = vsub.f32 1.0, %v71
    %v73 = vmul.f32 %v70, %v72
    %v74 = vadd.f32 %v70, %v73
    %vm75 = vweird.f32 %v69
    %vm76 = vweird.f32 %v70
    %vm77 = vmor %vm75, %vm76
    %v78 = vsel %vm77, %v70, %v74
    %v79 = vand.u32 2147483647, %v69
    %vm80 = vcmp.eq.f32.partialorder %v79, 8.507059e+37
    %v81 = vand.u32 %v69, 2147483648
    %v82 = vor.u32 1.1754944e-38, %v81
    %v83 = vsel %vm80, %v82, %v78
    %v84 = vmul.f32 1.0, %v83
    %v85 = vld [vmem:[#allocation5] sm:$0x1]
    %v86 = vld [vmem:[#allocation5 + $0x1] sm:$0x1]
    %v87 = vmul.f32 %v46, %v84
    %v88 = vperm.slane %v85, 0
    %v89 = vmul.f32 %v88, %v87
    %v90 = vperm.slane %v86, 0
    %v91 = vadd.f32 %v89, %v90
    %92 = vst [vmem:[#allocation7] sm:$0xff] %v91
    // Predicated region
    $region18: #{tpu_custom_call.1} parent=1 // pred_check
      _
    $region19: #{tpu_custom_call.1} parent=1 // pred_check_branch
      %94 = sbr.rel (0) target = $region21
    $region20: #{tpu_custom_call.1} parent=1 // pred_region
      %96 = vsyncadd [#allocation4], 0
      %s97 = smul.addr %s6, 8
      %s98 = scalar_lea.hbm %s2, %s97
      %s100 = sshll.u32 [#allocation7], 4
      %s101 = int_to_ptr.vmem [resolvable:$true] %s100
      %s102 = sshll.u32 %s98, 4
      %s103 = int_to_ptr.hbm [resolvable:$true] %s102
      %105 = dma.vmem_to_hbm [thread:$0]  %s101, 128, %s103, [#allocation4]
    $region21: #{tpu_custom_call.1} parent=1 // pred_fallthru
      _
    // Predicated region
    $region22: #{tpu_custom_call.1} parent=1 // pred_check
      _
    $region23: #{tpu_custom_call.1} parent=1 // pred_check_branch
      %107 = sbr.rel (0) target = $region25
    $region24: #{tpu_custom_call.1} parent=1 // pred_region
      %109 = dma.done [#allocation4], 128
    $region25: #{tpu_custom_call.1} parent=1 // pred_fallthru
      _
    %110 = vsyncpa [#allocation3], 1
    %111 = vsyncpa [#allocation6], 1
    %112 = vsyncpa [#allocation4], 1

// kernel: tpu_custom_call.1
$region0: #{tpu_custom_call.1}
  #allocation0 [shape = 'u32[]', space=smem, size = 0x4, offset = 0x4, fixed_abs, tag = 'smem constant byte address 0x4 - core index']
  #allocation1 [shape = 'u32[72,128]{1,0:T(1,128)}', space=vmem, size = 0x9000, scoped, tag = 'internal scratch']
  %s0 = inlined_call_operand.hbm [shape: f32[8,128], index: 0, kind: input, shape index: {}]
  %s1 = inlined_call_operand.hbm [shape: f32[2,128], index: 1, kind: input, shape index: {}]
  %s2 = inlined_call_operand.hbm [shape: f32[8,128], index: 2, kind: output, shape index: {}]
  %s3 = sld [smem:[#allocation0]]
  $region26: #{tpu_custom_call.1} parent=0
    _
  %s5 = ssub.s32 1, %s3
  %s6 = scalar_select 0, %s5, %s3
  $region1: #{tpu_custom_call.1} parent=0
    #allocation2 [shape = 'u8[4096]{0}', space=vmem, size = 0x1000, scoped, tag = 'input window, operand 0, single buffered']
    #allocation3 [shape = 's32[1]{0}', space=sflag, size = 0x4, scoped, tag = 'scoped memory for tpu_custom_call.1']
    #allocation4 [shape = 's32[1]{0}', space=sflag, size = 0x4, scoped, tag = 'scoped memory for tpu_custom_call.1']
    #allocation5 [shape = 'u8[1024]{0}', space=vmem, size = 0x400, scoped, tag = 'input window, operand 1, single buffered']
    #allocation6 [shape = 's32[1]{0}', space=sflag, size = 0x4, scoped, tag = 'scoped memory for tpu_custom_call.1']
    #allocation7 [shape = 'u8[4096]{0}', space=vmem, size = 0x1000, scoped, tag = 'output window, operand 0, single buffered']
    %7 = vsyncpa [#allocation3], 0
    %8 = vsyncpa [#allocation6], 0
    %9 = vsyncpa [#allocation4], 0
    // Predicated region
    $region2: #{tpu_custom_call.1} parent=1 // pred_check
      _
    $region3: #{tpu_custom_call.1} parent=1 // pred_check_branch
      %11 = sbr.rel (0) target = $region5
    $region4: #{tpu_custom_call.1} parent=1 // pred_region
      %13 = vsyncadd [#allocation3], 0
      %s15 = sshll.u32 %s0, 4
      %s16 = int_to_ptr.hbm [resolvable:$true] %s15
      %s17 = sshll.u32 [#allocation2], 4
      %s18 = int_to_ptr.vmem [resolvable:$true] %s17
      %20 = dma.hbm_to_vmem [thread:$0]  %s16, 128, %s18, [#allocation3]
    $region5: #{tpu_custom_call.1} parent=1 // pred_fallthru
      _
    // Predicated region
    $region6: #{tpu_custom_call.1} parent=1 // pred_check
      _
    $region7: #{tpu_custom_call.1} parent=1 // pred_check_branch
      %22 = sbr.rel (0) target = $region9
    $region8: #{tpu_custom_call.1} parent=1 // pred_region
      %24 = vsyncadd [#allocation6], 0
      %s26 = sshll.u32 %s1, 4
      %s27 = int_to_ptr.hbm [resolvable:$true] %s26
      %s28 = sshll.u32 [#allocation5], 4
      %s29 = int_to_ptr.vmem [resolvable:$true] %s28
      %31 = dma.hbm_to_vmem [thread:$0]  %s27, 32, %s29, [#allocation6]
    $region9: #{tpu_custom_call.1} parent=1 // pred_fallthru
      _
    // Predicated region
    $region10: #{tpu_custom_call.1} parent=1 // pred_check
      _
    $region11: #{tpu_custom_call.1} parent=1 // pred_check_branch
      %33 = sbr.rel (0) target = $region13
    $region12: #{tpu_custom_call.1} parent=1 // pred_region
      %35 = dma.done [#allocation3], 128
    $region13: #{tpu_custom_call.1} parent=1 // pred_fallthru
      _
    // Predicated region
    $region14: #{tpu_custom_call.1} parent=1 // pred_check
      _
    $region15: #{tpu_custom_call.1} parent=1 // pred_check_branch
      %37 = sbr.rel (0) target = $region17
    $region16: #{tpu_custom_call.1} parent=1 // pred_region
      %39 = dma.done [#allocation6], 32
    $region17: #{tpu_custom_call.1} parent=1 // pred_fallthru
      _
    %v40 = vld [vmem:[#allocation2] sm:$0xff]
    %41 = vadd.xlane.f32.xlu0 %v40
    %v42 = vpop.xlane.xlu0 %41
    %v43 = vmul.f32 %v42, 0.03125
    %v44 = vsub.f32 %v40, %v43
    %v45 = vmul.f32 %v44, %v44
    %v46 = vlaneseq
    %v47 = vand.u32 %v46, 127
    %vm48 = vcmp.lt.s32.totalorder %v47, 32
    %v49 = vsel %vm48, 1, 0
    %vm50 = vcmp.eq.s32.totalorder %v49, 1
    %v51 = vsel %vm50, %v45, 0.0
    %52 = vadd.xlane.f32.xlu0 %v51
    %v53 = vpop.xlane.xlu0 %52
    %v54 = vmul.f32 %v53, 0.032258064
    %v55 = vrsqrt.pop %v54
    %v56 = vmul.f32 %v55, %v54
    %v57 = vmul.f32 %v56, %v55
    %v58 = vmul.f32 0.5, %v57
    %v59 = vsub.f32 1.5, %v58
    %v60 = vmul.f32 %v55, %v59
    %v61 = vmul.f32 %v54, %v60
    %vm62 = vcmp.eq.f32.partialorder %v54, inf
    %v63 = vsel %vm62, %v54, %v61
    %vm64 = vcmp.eq.f32.partialorder %v54, 0.0
    %v65 = vand.u32 %v54, 2147483648
    %v66 = vsel %vm64, %v65, %v63
    %v67 = vadd.f32 %v66, 1e-10
    %v68 = vrcp.pop %v67
    %v69 = vmul.f32 %v67, %v68
    %v70 = vsub.f32 1.0, %v69
    %v71 = vmul.f32 %v68, %v70
    %v72 = vadd.f32 %v68, %v71
    %vm73 = vweird.f32 %v67
    %vm74 = vweird.f32 %v68
    %vm75 = vmor %vm73, %vm74
    %v76 = vsel %vm75, %v68, %v72
    %v77 = vand.u32 2147483647, %v67
    %vm78 = vcmp.eq.f32.partialorder %v77, 8.507059e+37
    %v79 = vand.u32 %v67, 2147483648
    %v80 = vor.u32 1.1754944e-38, %v79
    %v81 = vsel %vm78, %v80, %v76
    %v82 = vmul.f32 1.0, %v81
    %v83 = vld [vmem:[#allocation5] sm:$0x1]
    %v84 = vld [vmem:[#allocation5 + $0x1] sm:$0x1]
    %v85 = vmul.f32 %v44, %v82
    %v86 = vperm.slane %v83, 0
    %v87 = vmul.f32 %v86, %v85
    %v88 = vperm.slane %v84, 0
    %v89 = vadd.f32 %v87, %v88
    %90 = vst [vmem:[#allocation7] sm:$0xff] %v89
    // Predicated region
    $region18: #{tpu_custom_call.1} parent=1 // pred_check
      _
    $region19: #{tpu_custom_call.1} parent=1 // pred_check_branch
      %92 = sbr.rel (0) target = $region21
    $region20: #{tpu_custom_call.1} parent=1 // pred_region
      %94 = vsyncadd [#allocation4], 0
      %s96 = sshll.u32 [#allocation7], 4
      %s97 = int_to_ptr.vmem [resolvable:$true] %s96
      %s98 = sshll.u32 %s2, 4
      %s99 = int_to_ptr.hbm [resolvable:$true] %s98
      %101 = dma.vmem_to_hbm [thread:$0]  %s97, 128, %s99, [#allocation4]
    $region21: #{tpu_custom_call.1} parent=1 // pred_fallthru
      _
    // Predicated region
    $region22: #{tpu_custom_call.1} parent=1 // pred_check
      _
    $region23: #{tpu_custom_call.1} parent=1 // pred_check_branch
      %103 = sbr.rel (0) target = $region25
    $region24: #{tpu_custom_call.1} parent=1 // pred_region
      %105 = dma.done [#allocation4], 128
    $region25: #{tpu_custom_call.1} parent=1 // pred_fallthru
      _
    %106 = vsyncpa [#allocation3], 1
    %107 = vsyncpa [#allocation6], 1
    %108 = vsyncpa [#allocation4], 1

</llo_original>
